<compile_context>
chip_gen: v7x
topology: tpu7x:2x2x1
jax: 0.10.0
libtpu: 0.0.40
codegen_flags: <defaults>
</compile_context>

<pallas_src>
import functools
import math

import jax
import jax.numpy as jnp
from jax.experimental import pallas as pl
from jax.experimental.pallas import tpu as pltpu

EPS = 1e-5
MOMENTUM = 0.9

# VMEM budgets (bytes): stay well under v7x's 64 MiB physical VMEM while still
# giving multi-MiB tiles (amortizes the ~0.35 us/step pipeline overhead) on
# v5e/v6e's 128 MiB.
_VMEM_LIMIT = 48 << 20
_P1_TILE_BUDGET = 24 << 20   # pass 1: 2x input tile + f32 copy + f32 square
_P2_TILE_BUDGET = 20 << 20   # pass 2: 2x input + 2x output tile + f32 temp
_FAST_PATH_BYTES = 12 << 20  # fused single-kernel path working-set limit


def _round_up(a, b):
    return (a + b - 1) // b * b


def _choose_fold(n_rows, d, max_fold=64):
    """Lane-fold factor F: [N, D] -> [N/F, F*D] (free bitcast when F | N)."""
    if n_rows == 0 or d % 128 == 0:
        return 1
    # Smallest fold that makes the lane width a multiple of 128 -> unmasked,
    # full-width vst in the store stream (biggest single lever, esp. v5e).
    f128 = 128 // math.gcd(d, 128)
    if f128 <= max_fold and n_rows % f128 == 0:
        return f128
    # Fallback: smallest fold dividing N with cols >= 256 so the masked lane
    # remainder is amortized.
    for f in range(1, max_fold + 1):
        if n_rows % f == 0 and d * f >= 256:
            return f
    return 1


def _pick_tile_rows(rows, cols, bytes_per_row, budget):
    tr = max(32, (budget // max(bytes_per_row, 1)) // 32 * 32)
    return min(tr, _round_up(rows, 32))


def _colsum(x_f32):
    """Column sums of an [R, C] f32 tile.

    Large tiles use the MXU (ones @ x) so only the cast/square stay on the
    VPU -- keeps pass 1 HBM-bound on v7x where 3.2 TB/s would otherwise make
    the VPU reduction the limiter.  Tiny tiles just use a VPU reduction.
    """
    r = x_f32.shape[0]
    if r < 32:
        return jnp.sum(x_f32, axis=0, keepdims=True)
    ones = jnp.ones((8, r), jnp.float32)
    return jnp.dot(ones, x_f32, preferred_element_type=jnp.float32)[0:1, :]


# --------------------------- pass 1: column stats ---------------------------

def _colstats_kernel(x_ref, sum_ref, sumsq_ref, *, rows_total, steps_per_core):
    tile_rows = x_ref.shape[0]

    @pl.when(pl.program_id(1) == 0)
    def _init():
        sum_ref[...] = jnp.zeros_like(sum_ref)
        sumsq_ref[...] = jnp.zeros_like(sumsq_ref)

    # Logical (unclamped) row-tile index of this step; the index_map clamps the
    # DMA to the last real tile, and `valid <= 0` below zeroes any duplicate.
    blk = pl.program_id(0) * steps_per_core + pl.program_id(1)
    valid = rows_total - blk * tile_rows

    def _accumulate(xm):
        sum_ref[...] += _colsum(xm)
        sumsq_ref[...] += _colsum(xm * xm)

    @pl.when(valid >= tile_rows)           # interior tile: no mask needed
    def _full():
        _accumulate(x_ref[...].astype(jnp.float32))

    @pl.when(valid < tile_rows)            # ragged last tile / clamped dup
    def _ragged():
        x = x_ref[...].astype(jnp.float32)
        rid = jax.lax.broadcasted_iota(jnp.int32, (tile_rows, 1), 0)
        # Select (not multiply): out-of-bounds rows are undefined (may be NaN),
        # so they must be replaced, not scaled, before the reduction.
        _accumulate(jnp.where(rid < valid, x, 0.0))


# --------------------------- pass 2: normalize -------------------------------

def _affine_kernel(x_ref, scale_ref, shift_ref, y_ref):
    x = x_ref[...].astype(jnp.float32)
    y_ref[...] = (x * scale_ref[...] + shift_ref[...]).astype(y_ref.dtype)


# --------------------- fused fast path (fits in VMEM) ------------------------

def _fused_kernel(x_ref, lg_ref, bt_ref, y_ref, mean_ref, var_ref,
                  *, n, d, fold, eps):
    x = x_ref[...].astype(jnp.float32)                    # [rows, cols]
    s = _colsum(x)                                        # [1, cols]
    sq = _colsum(x * x)                                   # [1, cols]
    # Reduce the fold replicas down to per-feature stats (one vreg row of work).
    s_feat = sum(s[:, f * d:(f + 1) * d] for f in range(fold))    # [1, d]
    sq_feat = sum(sq[:, f * d:(f + 1) * d] for f in range(fold))  # [1, d]
    mean = s_feat / n
    # One-pass variance in f32 with a clamp; unbiased (N-1) like torch.var.
    var = jnp.maximum(sq_feat - n * mean * mean, 0.0) / jnp.float32(n - 1)
    inv_std = jax.lax.rsqrt(var + eps)
    scale = jnp.exp(lg_ref[...]) * inv_std                # [1, d]
    shift = bt_ref[...] - mean * scale                    # [1, d]
    scale_c = jnp.concatenate([scale] * fold, axis=1)     # [1, cols]
    shift_c = jnp.concatenate([shift] * fold, axis=1)     # [1, cols]
    y_ref[...] = (x * scale_c + shift_c).astype(y_ref.dtype)
    mean_ref[...] = mean
    var_ref[...] = var


def _fused_call(xf, log_gamma, beta, n, d, fold, eps, out_dtype):
    rows, cols = xf.shape
    lg2 = log_gamma.astype(jnp.float32).reshape(1, d)
    bt2 = beta.astype(jnp.float32).reshape(1, d)
    yf, bmean, bvar = pl.pallas_call(
        functools.partial(_fused_kernel, n=n, d=d, fold=fold, eps=eps),
        out_shape=(jax.ShapeDtypeStruct((rows, cols), out_dtype),
                   jax.ShapeDtypeStruct((1, d), jnp.float32),
                   jax.ShapeDtypeStruct((1, d), jnp.float32)),
        compiler_params=pltpu.CompilerParams(vmem_limit_bytes=_VMEM_LIMIT),
    )(xf, lg2, bt2)
    return yf, bmean.reshape((d,)), bvar.reshape((d,))


# --------------------- two-pass streaming path (large N) ---------------------

def _two_pass(xf, log_gamma, beta, n, d, fold, eps, out_dtype,
              tile_rows_p1=None, tile_rows_p2=None):
    rows, cols = xf.shape
    itemsize = jnp.dtype(xf.dtype).itemsize

    # ---- pass 1: per-column sum / sum-of-squares (streaming, HBM-bound) ----
    tr1 = tile_rows_p1 or _pick_tile_rows(
        rows, cols, cols * (2 * itemsize + 8), _P1_TILE_BUDGET)
    nblk = pl.cdiv(rows, tr1)
    nsplit = 2 if nblk >= 2 else 1        # v7x megacore: half the tiles per TC
    steps = pl.cdiv(nblk, nsplit)
    last_blk = nblk - 1

    sum_f, sumsq_f = pl.pallas_call(
        functools.partial(_colstats_kernel, rows_total=rows,
                          steps_per_core=steps),
        out_shape=(jax.ShapeDtypeStruct((nsplit, 1, cols), jnp.float32),
                   jax.ShapeDtypeStruct((nsplit, 1, cols), jnp.float32)),
        grid_spec=pltpu.PrefetchScalarGridSpec(
            num_scalar_prefetch=0,
            grid=(nsplit, steps),
            in_specs=[pl.BlockSpec(
                (tr1, cols),
                # Clamp so the (possibly duplicated) final step on core 1 still
                # reads a valid tile; its contribution is masked to zero.
                lambda c, i: (jnp.minimum(c * steps + i, last_blk), 0))],
            out_specs=(pl.BlockSpec((None, 1, cols), lambda c, i: (c, 0, 0)),
                       pl.BlockSpec((None, 1, cols), lambda c, i: (c, 0, 0)))),
        compiler_params=pltpu.CompilerParams(
            dimension_semantics=("parallel", "arbitrary"),
            vmem_limit_bytes=_VMEM_LIMIT),
    )(xf)

    # ---- tiny [D]-sized finalize (off the streaming critical path) ---------
    lg = log_gamma.astype(jnp.float32)
    bt = beta.astype(jnp.float32)
    bsum = sum_f.sum(axis=(0, 1)).reshape(fold, d).sum(axis=0)      # [D]
    bsumsq = sumsq_f.sum(axis=(0, 1)).reshape(fold, d).sum(axis=0)  # [D]
    bmean = bsum / n
    bvar = jnp.maximum(bsumsq - n * bmean * bmean, 0.0) / jnp.float32(n - 1)
    inv_std = jax.lax.rsqrt(bvar + eps)
    scale = jnp.exp(lg) * inv_std                                   # [D]
    shift = bt - bmean * scale                                      # [D]
    scale_f = jnp.tile(scale, fold).reshape(1, cols)
    shift_f = jnp.tile(shift, fold).reshape(1, cols)

    # ---- pass 2: y = x * scale + shift  (ragged last block: OOB stores drop)
    tr2 = tile_rows_p2 or _pick_tile_rows(
        rows, cols, cols * (4 * itemsize + 4), _P2_TILE_BUDGET)
    yf = pl.pallas_call(
        _affine_kernel,
        out_shape=jax.ShapeDtypeStruct((rows, cols), out_dtype),
        grid_spec=pltpu.PrefetchScalarGridSpec(
            num_scalar_prefetch=0,
            grid=(pl.cdiv(rows, tr2),),
            in_specs=[pl.BlockSpec((tr2, cols), lambda i: (i, 0)),
                      pl.BlockSpec((1, cols), lambda i: (0, 0)),
                      pl.BlockSpec((1, cols), lambda i: (0, 0))],
            out_specs=pl.BlockSpec((tr2, cols), lambda i: (i, 0))),
        compiler_params=pltpu.CompilerParams(
            dimension_semantics=("parallel",),
            vmem_limit_bytes=_VMEM_LIMIT),
    )(xf, scale_f, shift_f)
    return yf, bmean, bvar


# ------------------------------- public entry --------------------------------

def batchnorm_forward(x, log_gamma, beta, running_mean, running_var,
                      momentum=MOMENTUM, eps=EPS,
                      force_two_pass=False, tile_rows_p1=None,
                      tile_rows_p2=None):
    """Training-mode forward of the RealNVP BatchNorm layer.

    x: [..., D]; log_gamma / beta / running_*: [D].
    Returns (y, log_abs_det_jacobian, new_running_mean, new_running_var).
    Notes: batch variance is the unbiased (N-1) estimate (torch.var default,
    NaN for N == 1, same as PyTorch); running buffers are returned as new
    arrays (in-place buffer mutation has no JAX equivalent).
    """
    orig_shape = x.shape
    d = orig_shape[-1]
    x2 = x.reshape(-1, d)                       # free bitcast, native dtype
    n = x2.shape[0]
    itemsize = jnp.dtype(x.dtype).itemsize

    fold = _choose_fold(n, d)
    cols = d * fold
    rows = n // fold
    xf = x2.reshape(rows, cols)                 # free bitcast (fold | N)

    workset = rows * cols * (2 * itemsize + 8)  # in + out + f32 copy + square
    if (not force_two_pass) and workset <= _FAST_PATH_BYTES:
        yf, bmean, bvar = _fused_call(xf, log_gamma, beta, n, d, fold, eps,
                                      x.dtype)
    else:
        yf, bmean, bvar = _two_pass(xf, log_gamma, beta, n, d, fold, eps,
                                    x.dtype, tile_rows_p1, tile_rows_p2)

    y = yf.reshape(orig_shape)
    ladj_row = log_gamma.astype(jnp.float32) - 0.5 * jnp.log(bvar + eps)  # [D]
    # log|det J| is constant per row; keep the broadcast symbolic so it fuses
    # into the consumer instead of costing an [N, D] HBM write here.
    ladj = jnp.broadcast_to(ladj_row, orig_shape)

    new_rm = (running_mean * momentum
              + bmean.astype(running_mean.dtype) * (1.0 - momentum))
    new_rv = (running_var * momentum
              + bvar.astype(running_var.dtype) * (1.0 - momentum))
    return y, ladj, new_rm, new_rv


# ------------------------------- reference -----------------------------------

def _reference(x, log_gamma, beta, eps=EPS):
    d = x.shape[-1]
    x2 = x.reshape(-1, d)
    mean = x2.mean(0)
    var = x2.var(0, ddof=1)
    x_hat = (x - mean) / jnp.sqrt(var + eps)
    y = jnp.exp(log_gamma) * x_hat + beta
    ladj = jnp.broadcast_to(log_gamma - 0.5 * jnp.log(var + eps), x.shape)
    return y, ladj, mean, var


if __name__ == "__main__":
    key = jax.random.PRNGKey(0)
    k_x, k_g, k_b, k_x2 = jax.random.split(key, 4)

    D = 32
    log_gamma = 0.1 * jax.random.normal(k_g, (D,), dtype=jnp.float32)
    beta = 0.1 * jax.random.normal(k_b, (D,), dtype=jnp.float32)
    running_mean = jnp.zeros((D,), jnp.float32)
    running_var = jnp.ones((D,), jnp.float32)

    def check(x, atol, **kw):
        y, ladj, new_rm, new_rv = batchnorm_forward(
            x, log_gamma, beta, running_mean, running_var, **kw)
        jax.block_until_ready((y, ladj, new_rm, new_rv))
        y_r, ladj_r, mean_r, var_r = _reference(x, log_gamma, beta)
        assert jnp.allclose(y, y_r, atol=atol, rtol=atol), "y mismatch"
        assert jnp.allclose(ladj, ladj_r, atol=atol, rtol=atol), "ladj mismatch"
        assert jnp.allclose(new_rm,
                            running_mean * MOMENTUM + mean_r * (1 - MOMENTUM),
                            atol=atol, rtol=atol), "running_mean mismatch"
        assert jnp.allclose(new_rv,
                            running_var * MOMENTUM + var_r * (1 - MOMENTUM),
                            atol=atol, rtol=atol), "running_var mismatch"

    # Small input (B=2, T=8, D=32) -> fused single-kernel fast path.
    x_small = jax.random.normal(k_x, (2, 8, D), dtype=jnp.float32)
    check(x_small, atol=1e-5)

    # Medium ragged input -> forced two-pass streaming path with small tiles so
    # the grid exercises the 2-core split, clamped index_map, ragged-tile
    # masking in pass 1 and dropped out-of-bounds stores in pass 2.
    x_med = jax.random.normal(k_x2, (2500, D), dtype=jnp.float32)
    check(x_med, atol=1e-4, force_two_pass=True,
          tile_rows_p1=96, tile_rows_p2=96)

    print("KERNEL_OK")
</pallas_src>

<mosaic_0001>
module attributes {stable_mosaic.version = 11 : i64} {
  func.func @_fused_kernel(%arg0: memref<4x128xf32, #tpu.memory_space<vmem>>, %arg1: memref<1x32xf32, #tpu.memory_space<vmem>>, %arg2: memref<1x32xf32, #tpu.memory_space<vmem>>, %arg3: memref<4x128xf32, #tpu.memory_space<vmem>>, %arg4: memref<1x32xf32, #tpu.memory_space<vmem>>, %arg5: memref<1x32xf32, #tpu.memory_space<vmem>>) attributes {dimension_semantics = [], scalar_prefetch = 0 : i64, scratch_operands = 0 : i64, tpu.core_type = #tpu.core_type<tc>} {
    %c0 = arith.constant 0 : index
    %c0_0 = arith.constant 0 : index
    %0 = vector.load %arg0[%c0, %c0_0] : memref<4x128xf32, #tpu.memory_space<vmem>>, vector<4x128xf32>
    %cst = arith.constant dense<0.000000e+00> : vector<128xf32>
    %1 = vector.multi_reduction <add>, %0, %cst [0] : vector<4x128xf32> to vector<128xf32>
    %2 = vector.shape_cast %1 : vector<128xf32> to vector<1x128xf32>
    %3 = arith.mulf %0, %0 : vector<4x128xf32>
    %cst_1 = arith.constant dense<0.000000e+00> : vector<128xf32>
    %4 = vector.multi_reduction <add>, %3, %cst_1 [0] : vector<4x128xf32> to vector<128xf32>
    %5 = vector.shape_cast %4 : vector<128xf32> to vector<1x128xf32>
    %6 = vector.extract_strided_slice %2 {offsets = [0, 0], sizes = [1, 32], strides = [1, 1]} : vector<1x128xf32> to vector<1x32xf32>
    %cst_2 = arith.constant 0.000000e+00 : f32
    %7 = vector.broadcast %cst_2 : f32 to vector<1x32xf32>
    %8 = arith.addf %7, %6 : vector<1x32xf32>
    %9 = vector.extract_strided_slice %2 {offsets = [0, 32], sizes = [1, 32], strides = [1, 1]} : vector<1x128xf32> to vector<1x32xf32>
    %10 = arith.addf %8, %9 : vector<1x32xf32>
    %11 = vector.extract_strided_slice %2 {offsets = [0, 64], sizes = [1, 32], strides = [1, 1]} : vector<1x128xf32> to vector<1x32xf32>
    %12 = arith.addf %10, %11 : vector<1x32xf32>
    %13 = vector.extract_strided_slice %2 {offsets = [0, 96], sizes = [1, 32], strides = [1, 1]} : vector<1x128xf32> to vector<1x32xf32>
    %14 = arith.addf %12, %13 : vector<1x32xf32>
    %15 = vector.extract_strided_slice %5 {offsets = [0, 0], sizes = [1, 32], strides = [1, 1]} : vector<1x128xf32> to vector<1x32xf32>
    %cst_3 = arith.constant 0.000000e+00 : f32
    %16 = vector.broadcast %cst_3 : f32 to vector<1x32xf32>
    %17 = arith.addf %16, %15 : vector<1x32xf32>
    %18 = vector.extract_strided_slice %5 {offsets = [0, 32], sizes = [1, 32], strides = [1, 1]} : vector<1x128xf32> to vector<1x32xf32>
    %19 = arith.addf %17, %18 : vector<1x32xf32>
    %20 = vector.extract_strided_slice %5 {offsets = [0, 64], sizes = [1, 32], strides = [1, 1]} : vector<1x128xf32> to vector<1x32xf32>
    %21 = arith.addf %19, %20 : vector<1x32xf32>
    %22 = vector.extract_strided_slice %5 {offsets = [0, 96], sizes = [1, 32], strides = [1, 1]} : vector<1x128xf32> to vector<1x32xf32>
    %23 = arith.addf %21, %22 : vector<1x32xf32>
    %cst_4 = arith.constant 1.600000e+01 : f32
    %24 = vector.broadcast %cst_4 : f32 to vector<1x32xf32>
    %25 = arith.divf %14, %24 : vector<1x32xf32>
    %cst_5 = arith.constant 1.600000e+01 : f32
    %26 = vector.broadcast %cst_5 : f32 to vector<1x32xf32>
    %27 = arith.mulf %26, %25 : vector<1x32xf32>
    %28 = arith.mulf %27, %25 : vector<1x32xf32>
    %29 = arith.subf %23, %28 : vector<1x32xf32>
    %cst_6 = arith.constant 0.000000e+00 : f32
    %30 = vector.broadcast %cst_6 : f32 to vector<1x32xf32>
    %31 = arith.maximumf %29, %30 : vector<1x32xf32>
    %cst_7 = arith.constant 1.500000e+01 : f32
    %32 = vector.broadcast %cst_7 : f32 to vector<1x32xf32>
    %33 = arith.divf %31, %32 : vector<1x32xf32>
    %cst_8 = arith.constant 9.99999974E-6 : f32
    %34 = vector.broadcast %cst_8 : f32 to vector<1x32xf32>
    %35 = arith.addf %33, %34 : vector<1x32xf32>
    %36 = math.rsqrt %35 : vector<1x32xf32>
    %c0_9 = arith.constant 0 : index
    %c0_10 = arith.constant 0 : index
    %37 = vector.load %arg1[%c0_9, %c0_10] : memref<1x32xf32, #tpu.memory_space<vmem>>, vector<1x32xf32>
    %38 = math.exp %37 : vector<1x32xf32>
    %39 = arith.mulf %38, %36 : vector<1x32xf32>
    %c0_11 = arith.constant 0 : index
    %c0_12 = arith.constant 0 : index
    %40 = vector.load %arg2[%c0_11, %c0_12] : memref<1x32xf32, #tpu.memory_space<vmem>>, vector<1x32xf32>
    %41 = arith.mulf %25, %39 : vector<1x32xf32>
    %42 = arith.subf %40, %41 : vector<1x32xf32>
    %43 = tpu.concatenate %39, %39, %39, %39 in 1 : vector<1x32xf32>, vector<1x32xf32>, vector<1x32xf32>, vector<1x32xf32> -> vector<1x128xf32>
    %44 = tpu.concatenate %42, %42, %42, %42 in 1 : vector<1x32xf32>, vector<1x32xf32>, vector<1x32xf32>, vector<1x32xf32> -> vector<1x128xf32>
    %45 = vector.broadcast %43 : vector<1x128xf32> to vector<4x128xf32>
    %46 = arith.mulf %0, %45 : vector<4x128xf32>
    %47 = vector.broadcast %44 : vector<1x128xf32> to vector<4x128xf32>
    %48 = arith.addf %46, %47 : vector<4x128xf32>
    %c0_13 = arith.constant 0 : index
    %c0_14 = arith.constant 0 : index
    %49 = vector.load %arg3[%c0_13, %c0_14] : memref<4x128xf32, #tpu.memory_space<vmem>>, vector<4x128xf32>
    tpu.vector_store %arg3[%c0_13, %c0_14], %48 {strides = array<i32>} : memref<4x128xf32, #tpu.memory_space<vmem>>, vector<4x128xf32>,
    %c0_15 = arith.constant 0 : index
    %c0_16 = arith.constant 0 : index
    %50 = vector.load %arg4[%c0_15, %c0_16] : memref<1x32xf32, #tpu.memory_space<vmem>>, vector<1x32xf32>
    tpu.vector_store %arg4[%c0_15, %c0_16], %25 {strides = array<i32>} : memref<1x32xf32, #tpu.memory_space<vmem>>, vector<1x32xf32>,
    %c0_17 = arith.constant 0 : index
    %c0_18 = arith.constant 0 : index
    %51 = vector.load %arg5[%c0_17, %c0_18] : memref<1x32xf32, #tpu.memory_space<vmem>>, vector<1x32xf32>
    tpu.vector_store %arg5[%c0_17, %c0_18], %33 {strides = array<i32>} : memref<1x32xf32, #tpu.memory_space<vmem>>, vector<1x32xf32>,
    return
  }
}

</mosaic_0001>

<llo_original>
// kernel: tpu_custom_call.1
$region0: #{tpu_custom_call.1}
  #allocation0 [shape = 'u32[]', space=smem, size = 0x4, offset = 0x4, fixed_abs, tag = 'smem constant byte address 0x4 - core index']
  #allocation1 [shape = 'u32[144,128]{1,0:T(1,128)}', space=vmem, size = 0x12000, scoped, tag = 'internal scratch']
  %s0 = inlined_call_operand.hbm [shape: f32[4,128], index: 0, kind: input, shape index: {}]
  %s1 = inlined_call_operand.vmem [shape: f32[1,32], index: 1, kind: input, shape index: {}]
  %s2 = inlined_call_operand.vmem [shape: f32[1,32], index: 2, kind: input, shape index: {}]
  %s3 = inlined_call_operand.hbm [shape: f32[4,128], index: 3, kind: output, shape index: {0}]
  %s4 = inlined_call_operand.hbm [shape: f32[1,32], index: 4, kind: output, shape index: {1}]
  %s5 = inlined_call_operand.hbm [shape: f32[1,32], index: 5, kind: output, shape index: {2}]
  %6 = xla_tuple %s3, %s4, %s5
  %s7 = sld [smem:[#allocation0]]
  $region42: #{tpu_custom_call.1} parent=0
    _
  %s9 = ssub.s32 1, %s7
  %s10 = scalar_select 0, %s9, %s7
  $region1: #{tpu_custom_call.1} parent=0
    #allocation2 [shape = 'u8[2048]{0}', space=vmem, size = 0x800, scoped, tag = 'input window, operand 0, single buffered']
    #allocation3 [shape = 's32[1]{0}', space=sflag, size = 0x4, scoped, tag = 'scoped memory for tpu_custom_call.1']
    #allocation4 [shape = 's32[1]{0}', space=sflag, size = 0x4, scoped, tag = 'scoped memory for tpu_custom_call.1']
    #allocation5 [shape = 'u8[2048]{0}', space=vmem, size = 0x800, scoped, tag = 'output window, operand 0, single buffered']
    #allocation6 [shape = 'u8[512]{0}', space=vmem, size = 0x400, scoped, tag = 'output window, operand 1, single buffered']
    #allocation7 [shape = 's32[1]{0}', space=sflag, size = 0x4, scoped, tag = 'scoped memory for tpu_custom_call.1']
    #allocation8 [shape = 'u8[512]{0}', space=vmem, size = 0x400, scoped, tag = 'output window, operand 2, single buffered']
    %11 = vsyncpa [#allocation3], 0
    %12 = vsyncpa [#allocation4], 0
    %13 = vsyncpa [#allocation7], 0
    // Predicated region
    $region2: #{tpu_custom_call.1} parent=1 // pred_check
      _
    $region3: #{tpu_custom_call.1} parent=1 // pred_check_branch
      %15 = sbr.rel (0) target = $region5
    $region4: #{tpu_custom_call.1} parent=1 // pred_region
      %s17 = ssub.s32 64, 64
      %18 = vsyncadd [#allocation3], %s17
      %s20 = sshll.u32 [#allocation2], 4
      %s21 = int_to_ptr.vmem [resolvable:$true] %s20
      %23 = dma.hbm_to_vmem [thread:$0]  %s0, 64, %s21, [#allocation3]
    $region5: #{tpu_custom_call.1} parent=1 // pred_fallthru
      _
    // Predicated region
    $region6: #{tpu_custom_call.1} parent=1 // pred_check
      _
    $region7: #{tpu_custom_call.1} parent=1 // pred_check_branch
      %25 = sbr.rel (0) target = $region9
    $region8: #{tpu_custom_call.1} parent=1 // pred_region
      _
    $region9: #{tpu_custom_call.1} parent=1 // pred_fallthru
      _
    // Predicated region
    $region10: #{tpu_custom_call.1} parent=1 // pred_check
      _
    $region11: #{tpu_custom_call.1} parent=1 // pred_check_branch
      %27 = sbr.rel (0) target = $region13
    $region12: #{tpu_custom_call.1} parent=1 // pred_region
      _
    $region13: #{tpu_custom_call.1} parent=1 // pred_fallthru
      _
    // Predicated region
    $region14: #{tpu_custom_call.1} parent=1 // pred_check
      _
    $region15: #{tpu_custom_call.1} parent=1 // pred_check_branch
      %29 = sbr.rel (0) target = $region17
    $region16: #{tpu_custom_call.1} parent=1 // pred_region
      %30 = dma.done [#allocation3], 64
    $region17: #{tpu_custom_call.1} parent=1 // pred_fallthru
      _
    %v31 = vld [vmem:[#allocation2] sm:$0xf]
    %vm32 = vcmask 1043456
    %v33 = vsel %vm32, %v31, 0.0
    %v34 = vrot.slane %v33, 4
    %v35 = vadd.f32 %v33, %v34
    %v36 = vrot.slane %v35, 2
    %v37 = vadd.f32 %v35, %v36
    %v38 = vrot.slane %v37, 1
    %v39 = vadd.f32 %v37, %v38
    %v40 = vmul.f32 %v31, %v31
    %v41 = vsel %vm32, %v40, 0.0
    %v42 = vrot.slane %v41, 4
    %v43 = vadd.f32 %v41, %v42
    %v44 = vrot.slane %v43, 2
    %v45 = vadd.f32 %v43, %v44
    %v46 = vrot.slane %v45, 1
    %v47 = vadd.f32 %v45, %v46
    %v48 = vadd.f32 %v39, 0.0
    %50 = vrot.lane.b32.xlu0 %v39, 96
    %v51 = vpop.permute.xlu0 %50
    %v53 = vadd.f32 %v48, %v51
    %54 = vrot.lane.b32.xlu0 %v39, 64
    %v55 = vpop.permute.xlu0 %54
    %v57 = vadd.f32 %v53, %v55
    %58 = vrot.lane.b32.xlu0 %v39, 32
    %v59 = vpop.permute.xlu0 %58
    %v61 = vadd.f32 %v57, %v59
    %v62 = vadd.f32 %v47, 0.0
    %64 = vrot.lane.b32.xlu0 %v47, 96
    %v65 = vpop.permute.xlu0 %64
    %v67 = vadd.f32 %v62, %v65
    %68 = vrot.lane.b32.xlu0 %v47, 64
    %v69 = vpop.permute.xlu0 %68
    %v71 = vadd.f32 %v67, %v69
    %72 = vrot.lane.b32.xlu0 %v47, 32
    %v73 = vpop.permute.xlu0 %72
    %v75 = vadd.f32 %v71, %v73
    %v76 = vrcp.pop 16.0
    %v77 = vmul.f32 %v61, %v76
    %v78 = vmul.f32 %v77, 16.0
    %v79 = vmul.f32 %v78, %v77
    %v80 = vsub.f32 %v75, %v79
    %v81 = vmax.f32 %v80, 0.0
    %v82 = vrcp.pop 15.0
    %v83 = vmul.f32 %v81, %v82
    %v84 = vadd.f32 %v83, 1e-05
    %v85 = vrsqrt.pop %v84
    %v86 = vld [vmem:[%s1] sm:$0x1]
    %v87 = vmul.f32 %v86, 1.442695
    %v88 = vpow.pop %v87
    %v89 = vmul.f32 %v88, %v85
    %v90 = vld [vmem:[%s2] sm:$0x1]
    %v91 = vmul.f32 %v77, %v89
    %v92 = vsub.f32 %v90, %v91
    %v94 = vlaneseq
    %v95 = vshrl.u32 %v94, 7
    %v96 = vsub.s32 0, %v95
    %v97 = vrot.slane %v89, %v96
    %98 = vrot.lane.b32.xlu0 %v97, 32
    %v99 = vpop.permute.xlu0 %98
    %101 = vrot.lane.b32.xlu0 %v97, 64
    %v102 = vpop.permute.xlu0 %101
    %104 = vrot.lane.b32.xlu0 %v97, 96
    %v105 = vpop.permute.xlu0 %104
    %vm107 = vcmask 261120
    %v108 = vsel %vm107, %v89, %v99
    %vm109 = vcmask 523264
    %v110 = vsel %vm109, %v108, %v102
    %vm111 = vcmask 785408
    %v112 = vsel %vm111, %v110, %v105
    %v114 = vlaneseq
    %v115 = vshrl.u32 %v114, 7
    %v116 = vsub.s32 0, %v115
    %v117 = vrot.slane %v92, %v116
    %118 = vrot.lane.b32.xlu0 %v117, 32
    %v119 = vpop.permute.xlu0 %118
    %121 = vrot.lane.b32.xlu0 %v117, 64
    %v122 = vpop.permute.xlu0 %121
    %124 = vrot.lane.b32.xlu0 %v117, 96
    %v125 = vpop.permute.xlu0 %124
    %v127 = vsel %vm107, %v92, %v119
    %v128 = vsel %vm109, %v127, %v122
    %v129 = vsel %vm111, %v128, %v125
    %v130 = vlaneseq
    %v131 = vshrl.u32 %v130, 7
    %v132 = vsub.s32 0, %v131
    %v133 = vrot.slane %v112, %v132
    %v134 = vmul.f32 %v31, %v133
    %v135 = vlaneseq
    %v136 = vshrl.u32 %v135, 7
    %v137 = vsub.s32 0, %v136
    %v138 = vrot.slane %v129, %v137
    %v139 = vadd.f32 %v134, %v138
    %140 = vst [vmem:[#allocation5] sm:$0xf] %v139
    %vm141 = vcmask 253952
    %142 = vst.msk [vmem:[#allocation6] sm:$0x1] %vm141, %v77
    %143 = vst.msk [vmem:[#allocation8] sm:$0x1] %vm141, %v83
    // Predicated region
    $region18: #{tpu_custom_call.1} parent=1 // pred_check
      _
    $region19: #{tpu_custom_call.1} parent=1 // pred_check_branch
      %145 = sbr.rel (0) target = $region21
    $region20: #{tpu_custom_call.1} parent=1 // pred_region
      %s147 = ssub.s32 64, 64
      %148 = vsyncadd [#allocation4], %s147
      %s150 = sshll.u32 [#allocation5], 4
      %s151 = int_to_ptr.vmem [resolvable:$true] %s150
      %153 = dma.vmem_to_hbm [thread:$0]  %s151, 64, %s3, [#allocation4]
    $region21: #{tpu_custom_call.1} parent=1 // pred_fallthru
      _
    // Predicated region
    $region22: #{tpu_custom_call.1} parent=1 // pred_check
      _
    $region23: #{tpu_custom_call.1} parent=1 // pred_check_branch
      %155 = sbr.rel (0) target = $region25
    $region24: #{tpu_custom_call.1} parent=1 // pred_region
      %s157 = ssub.s32 16, 16
      %158 = vsyncadd [#allocation7], %s157
      %s160 = sshll.u32 [#allocation6], 4
      %s161 = int_to_ptr.vmem [resolvable:$true] %s160
      %163 = dma.vmem_to_hbm [thread:$0]  %s161, 16, %s4, [#allocation7]
    $region25: #{tpu_custom_call.1} parent=1 // pred_fallthru
      _
    // Predicated region
    $region26: #{tpu_custom_call.1} parent=1 // pred_check
      _
    $region27: #{tpu_custom_call.1} parent=1 // pred_check_branch
      %165 = sbr.rel (0) target = $region29
    $region28: #{tpu_custom_call.1} parent=1 // pred_region
      %s167 = ssub.s32 16, 16
      %168 = vsyncadd [#allocation7], %s167
      %s170 = sshll.u32 [#allocation8], 4
      %s171 = int_to_ptr.vmem [resolvable:$true] %s170
      %173 = dma.vmem_to_hbm [thread:$0]  %s171, 16, %s5, [#allocation7]
    $region29: #{tpu_custom_call.1} parent=1 // pred_fallthru
      _
    // Predicated region
    $region30: #{tpu_custom_call.1} parent=1 // pred_check
      _
    $region31: #{tpu_custom_call.1} parent=1 // pred_check_branch
      %175 = sbr.rel (0) target = $region33
    $region32: #{tpu_custom_call.1} parent=1 // pred_region
      %176 = dma.done [#allocation4], 64
    $region33: #{tpu_custom_call.1} parent=1 // pred_fallthru
      _
    // Predicated region
    $region34: #{tpu_custom_call.1} parent=1 // pred_check
      _
    $region35: #{tpu_custom_call.1} parent=1 // pred_check_branch
      %178 = sbr.rel (0) target = $region37
    $region36: #{tpu_custom_call.1} parent=1 // pred_region
      %179 = dma.done [#allocation7], 16
    $region37: #{tpu_custom_call.1} parent=1 // pred_fallthru
      _
    // Predicated region
    $region38: #{tpu_custom_call.1} parent=1 // pred_check
      _
    $region39: #{tpu_custom_call.1} parent=1 // pred_check_branch
      %181 = sbr.rel (0) target = $region41
    $region40: #{tpu_custom_call.1} parent=1 // pred_region
      %182 = dma.done [#allocation7], 16
    $region41: #{tpu_custom_call.1} parent=1 // pred_fallthru
      _
    %183 = vsyncpa [#allocation3], 1
    %184 = vsyncpa [#allocation4], 1
    %185 = vsyncpa [#allocation7], 1

</llo_original>
